<compile_context>
chip_gen: v5e
topology: v5e:2x2
jax: 0.10.0
libtpu: 0.0.40
codegen_flags: <defaults>
</compile_context>

<pallas_src>
import functools

import jax
import jax.numpy as jnp
from jax.experimental import pallas as pl
from jax.experimental.pallas import tpu as pltpu

LEAKY_SLOPE = 0.01   # PyTorch LeakyReLU default negative_slope
BN_EPS = 1e-5
STATS_FLOOR = 1e-10


# ---------------------------------------------------------------------------
# Helpers
# ---------------------------------------------------------------------------

@functools.lru_cache(maxsize=1)
def _vmem_limit_bytes():
    """Scoped-VMEM limit: above v5e/v6e 16/32 MiB defaults, with headroom on v7x (64 MiB)."""
    try:
        cap = pltpu.get_tpu_info().vmem_capacity_bytes
    except Exception:  # conservative fallback if the query is unavailable
        cap = 64 * 1024 * 1024
    return int(min(96 * 1024 * 1024, cap * 3 // 4))


def _cout_tile(c, pref=512):
    """Largest lane-dense tile <= pref that divides c (or c itself at small sizes)."""
    if c <= pref:
        return c
    for t in range(pref, 127, -128):
        if c % t == 0:
            return t
    return c


def _leaky(x):
    return jnp.where(x >= 0, x, LEAKY_SLOPE * x)


# ---------------------------------------------------------------------------
# Pallas kernels
# ---------------------------------------------------------------------------

def _tdnn_pair_kernel(x_ref, w1_ref, b1_ref, s1_ref, t1_ref,
                      w2_ref, b2_ref, s2_ref, t2_ref, o_ref, *, k, dil, t_out):
    """Fused TDNN pair: dilated conv + LReLU + BN, then 1x1 conv + LReLU + BN.

    Grid is (B,).  The dilated conv is a single MXU contraction over k*Cin:
    the k shifted tap slabs are concatenated along lanes (im2col) and contracted
    against w1 reshaped (k*Cin, Cmid).  When k == 1 the input is already the
    im2col slab (frame1 builds it in the wrapper) or a plain 1x1 conv input.

    x_ref:  (1, T_in, Cin)    bf16
    w1_ref: (k*Cin, Cmid)     bf16   b1/s1/t1: (1, Cmid) f32
    w2_ref: (Cmid, Cout)      bf16   b2/s2/t2: (1, Cout) f32
    o_ref:  (1, T_out, Cout)  bf16
    """
    if k == 1:
        xc = x_ref[0]                                           # (T_out, K) bf16
    else:
        # im2col in lanes: [tap0 | tap1 | ...] -> (T_out, k*Cin) bf16
        xc = jnp.concatenate(
            [x_ref[0, tap * dil: tap * dil + t_out, :] for tap in range(k)],
            axis=-1)

    y = jnp.dot(xc, w1_ref[...], preferred_element_type=jnp.float32)   # MXU, f32 acc
    y = _leaky(y + b1_ref[...])                                        # conv bias -> LReLU
    y = y * s1_ref[...] + t1_ref[...]                                  # folded BN (inference)

    y2 = jnp.dot(y.astype(jnp.bfloat16), w2_ref[...],
                 preferred_element_type=jnp.float32)                   # 1x1 conv
    y2 = _leaky(y2 + b2_ref[...])
    y2 = y2 * s2_ref[...] + t2_ref[...]
    o_ref[0, :, :] = y2.astype(o_ref.dtype)


def _tdnn9_stats_kernel(x_ref, w_ref, b_ref, s_ref, t_ref, o_ref, *, floor):
    """frame9 (1x1 conv + LReLU + BN) fused with StatsPool for one (batch, Cout tile).

    The (T, tn) conv output never leaves VMEM; only per-channel mean/std are stored.
    Two-pass residual form matches the PyTorch reference exactly (floor applied to
    sum(res^2) before dividing by t).

    x_ref: (1, T, Cin) bf16   w_ref: (Cin, tn) bf16   b/s/t: (1, tn) f32
    o_ref: (1, 2, tn)  f32    (row 0 = mean, row 1 = std)
    """
    y = jnp.dot(x_ref[0], w_ref[...], preferred_element_type=jnp.float32)   # (T, tn)
    y = _leaky(y + b_ref[...])
    y = y * s_ref[...] + t_ref[...]

    t = y.shape[0]
    mean = jnp.mean(y, axis=0, keepdims=True)            # (1, tn)
    res = y - mean
    num = jnp.sum(res * res, axis=0, keepdims=True)      # (1, tn)
    std = jnp.sqrt(jnp.maximum(num, floor) / t)
    # Sublane stack (cheap); avoids a lane-dim concatenation/relayout.
    o_ref[0] = jnp.concatenate([mean, std], axis=0)      # (2, tn)


def _head_kernel(x_ref,
                 we_ref, be_ref, se_ref, te_ref,          # fc_embed + norm_embed
                 wh_ref, bh_ref, sh_ref, th_ref,          # xvechead fc_hidden + bn
                 wf_ref, bf_ref,                          # xvechead fc (pre-padded classes)
                 o_ref):
    """fc_embed -> LReLU -> BN -> fc_hidden -> LReLU -> BN -> fc, untiled (grid=())."""
    x = x_ref[...].astype(jnp.bfloat16)                                      # (B, 6H)
    e = jnp.dot(x, we_ref[...], preferred_element_type=jnp.float32) + be_ref[...]
    e = _leaky(e)
    e = e * se_ref[...] + te_ref[...]                                        # norm_embed
    h = jnp.dot(e.astype(jnp.bfloat16), wh_ref[...],
                preferred_element_type=jnp.float32) + bh_ref[...]
    h = _leaky(h)
    h = h * sh_ref[...] + th_ref[...]                                        # xvechead bn
    logits = jnp.dot(h.astype(jnp.bfloat16), wf_ref[...],
                     preferred_element_type=jnp.float32) + bf_ref[...]
    o_ref[...] = logits


# ---------------------------------------------------------------------------
# Wrappers
# ---------------------------------------------------------------------------

def tdnn_pair(x, blk):
    """Fused (dilated conv -> 1x1 conv) TDNN pair. x: (B, T_in, Cin) bf16."""
    B, T_in, Cin = x.shape
    k, dil = blk["k"], blk["dil"]
    c1, c2 = blk["c1"], blk["c2"]
    Cmid = c1["w"].shape[1]            # c1["w"] is (k*Cin, Cmid)
    Cout = c2["w"].shape[1]
    T_out = T_in - dil * (k - 1)

    if blk["wrapper_im2col"] and k > 1:
        # frame1: Cin is tiny, build the im2col slab in XLA (cheap) so the kernel
        # runs one K = k*Cin MXU contraction on a sublane-aligned block.
        x = jnp.concatenate(
            [x[:, tap * dil: tap * dil + T_out, :] for tap in range(k)], axis=-1)
        k_eff, T_eff, C_eff = 1, T_out, k * Cin
    else:
        k_eff, T_eff, C_eff = k, T_in, Cin

    kernel = functools.partial(_tdnn_pair_kernel, k=k_eff, dil=dil, t_out=T_out)
    return pl.pallas_call(
        kernel,
        out_shape=jax.ShapeDtypeStruct((B, T_out, Cout), jnp.bfloat16),
        grid=(B,),
        in_specs=[
            pl.BlockSpec((1, T_eff, C_eff), lambda b: (b, 0, 0)),   # x
            pl.BlockSpec((k * Cin, Cmid), lambda b: (0, 0)),        # w1 (resident)
            pl.BlockSpec((1, Cmid), lambda b: (0, 0)),              # b1
            pl.BlockSpec((1, Cmid), lambda b: (0, 0)),              # scale1
            pl.BlockSpec((1, Cmid), lambda b: (0, 0)),              # shift1
            pl.BlockSpec((Cmid, Cout), lambda b: (0, 0)),           # w2 (resident)
            pl.BlockSpec((1, Cout), lambda b: (0, 0)),              # b2
            pl.BlockSpec((1, Cout), lambda b: (0, 0)),              # scale2
            pl.BlockSpec((1, Cout), lambda b: (0, 0)),              # shift2
        ],
        out_specs=pl.BlockSpec((1, T_out, Cout), lambda b: (b, 0, 0)),
        compiler_params=pltpu.CompilerParams(
            dimension_semantics=("parallel",),        # batch shards across TCs (v7x)
            vmem_limit_bytes=_vmem_limit_bytes()),
    )(x, c1["w"], c1["b"], c1["scale"], c1["shift"],
      c2["w"], c2["b"], c2["scale"], c2["shift"])


def tdnn9_stats(x, c, *, pref_tile=512, floor=STATS_FLOOR):
    """frame9 + StatsPool fused. x: (B, T, Cin) bf16 -> (B, 2*Cout) f32 = [means, stds]."""
    B, T, Cin = x.shape
    Cout = c["w"].shape[1]             # c["w"] is (Cin, Cout)
    tn = _cout_tile(Cout, pref_tile)
    n_j = Cout // tn

    kernel = functools.partial(_tdnn9_stats_kernel, floor=floor)
    out = pl.pallas_call(
        kernel,
        out_shape=jax.ShapeDtypeStruct((B, 2, Cout), jnp.float32),
        grid=(B, n_j),
        in_specs=[
            pl.BlockSpec((1, T, Cin), lambda b, j: (b, 0, 0)),  # x (resident across j)
            pl.BlockSpec((Cin, tn), lambda b, j: (0, j)),       # w Cout tile
            pl.BlockSpec((1, tn), lambda b, j: (0, j)),         # b
            pl.BlockSpec((1, tn), lambda b, j: (0, j)),         # scale
            pl.BlockSpec((1, tn), lambda b, j: (0, j)),         # shift
        ],
        out_specs=pl.BlockSpec((1, 2, tn), lambda b, j: (b, 0, j)),
        compiler_params=pltpu.CompilerParams(
            dimension_semantics=("parallel", "parallel"),
            vmem_limit_bytes=_vmem_limit_bytes()),
    )(x, c["w"], c["b"], c["scale"], c["shift"])
    # (B, 2, Cout) -> (B, 2*Cout) == concat([means, stds], axis=1), matching PyTorch.
    return out.reshape(B, 2 * Cout)


def head(x, p, n_classes):
    """fc_embed + norm_embed + XVecHead, untiled; wf/bf pre-padded to 128-lane multiple."""
    B = x.shape[0]
    n_pad = p["wf"].shape[1]
    out = pl.pallas_call(
        _head_kernel,
        out_shape=jax.ShapeDtypeStruct((B, n_pad), jnp.float32),
        compiler_params=pltpu.CompilerParams(vmem_limit_bytes=_vmem_limit_bytes()),
    )(x, p["we"], p["be"], p["se"], p["te"],
      p["wh"], p["bh"], p["sh"], p["th"], p["wf"], p["bf"])
    return out[:, :n_classes]


def etdnn_forward(x, params):
    x = x.astype(jnp.bfloat16)
    for blk in params["pairs"]:
        x = tdnn_pair(x, blk)
    stats = tdnn9_stats(x, params["frame9"])          # frame9 + StatsPool fused
    return head(stats, params["head"], params["num_classes"])


# ---------------------------------------------------------------------------
# Pure-JAX reference (mirrors the kernel dtype strategy) for correctness check
# ---------------------------------------------------------------------------

def etdnn_reference(x, params):
    def block(x_bf, w2d, b, scale, shift):
        y = jnp.dot(x_bf, w2d, preferred_element_type=jnp.float32)
        return _leaky(y + b) * scale + shift

    x = x.astype(jnp.bfloat16)
    for blk in params["pairs"]:
        k, dil = blk["k"], blk["dil"]
        c1, c2 = blk["c1"], blk["c2"]
        T = x.shape[1]
        t_out = T - dil * (k - 1)
        xc = jnp.concatenate(
            [x[:, i * dil: i * dil + t_out, :] for i in range(k)], axis=-1)
        y = block(xc, c1["w"], c1["b"], c1["scale"], c1["shift"])
        x = block(y.astype(jnp.bfloat16), c2["w"], c2["b"], c2["scale"],
                  c2["shift"]).astype(jnp.bfloat16)
    f9 = params["frame9"]
    y9 = block(x, f9["w"], f9["b"], f9["scale"], f9["shift"])     # (B, T, 3H) f32
    mean = jnp.mean(y9, axis=1)
    num = jnp.sum((y9 - mean[:, None, :]) ** 2, axis=1)
    std = jnp.sqrt(jnp.maximum(num, STATS_FLOOR) / y9.shape[1])
    s = jnp.concatenate([mean, std], axis=1)                      # (B, 6H)
    hp = params["head"]
    e = block(s.astype(jnp.bfloat16), hp["we"], hp["be"], hp["se"], hp["te"])
    h = block(e.astype(jnp.bfloat16), hp["wh"], hp["bh"], hp["sh"], hp["th"])
    logits = jnp.dot(h.astype(jnp.bfloat16), hp["wf"],
                     preferred_element_type=jnp.float32) + hp["bf"]
    return logits[:, :params["num_classes"]]


# ---------------------------------------------------------------------------
# Deterministic parameter construction
# ---------------------------------------------------------------------------

def _fold_bn(key, c):
    k1, k2, k3 = jax.random.split(key, 3)
    gamma = 1.0 + 0.01 * jax.random.normal(k1, (1, c), jnp.float32)
    beta = 0.01 * jax.random.normal(k2, (1, c), jnp.float32)
    run_mean = 0.01 * jax.random.normal(k3, (1, c), jnp.float32)
    run_var = jnp.ones((1, c), jnp.float32)
    scale = gamma / jnp.sqrt(run_var + BN_EPS)
    shift = beta - run_mean * scale
    return scale, shift


def _conv_params(key, cin, cout, k):
    kw, kb, kbn = jax.random.split(key, 3)
    # Weight stored pre-reshaped as (k*cin, cout): tap-major rows match the
    # lane-concatenated im2col column order used by the kernels.
    w = (0.05 * jax.random.normal(kw, (k * cin, cout), jnp.float32)).astype(jnp.bfloat16)
    b = 0.05 * jax.random.normal(kb, (1, cout), jnp.float32)
    scale, shift = _fold_bn(kbn, cout)
    return {"w": w, "b": b, "scale": scale, "shift": shift}


def make_params(key, feat, hidden, embed, head_hidden, n_classes):
    # Dilated convs (frame1/3/5/7); each is fused with the following 1x1 conv
    # (frame2/4/6/8).  frame9 (1x1, hidden -> 3*hidden) is fused with StatsPool.
    pair_cfgs = [
        (feat, hidden, 5, 1, True),     # frame1+2: wrapper-side im2col (Cin tiny)
        (hidden, hidden, 3, 2, False),  # frame3+4
        (hidden, hidden, 3, 3, False),  # frame5+6
        (hidden, hidden, 3, 4, False),  # frame7+8
    ]
    pairs = []
    for cin, cmid, k, dil, pre in pair_cfgs:
        key, k1, k2 = jax.random.split(key, 3)
        pairs.append({"k": k, "dil": dil, "wrapper_im2col": pre,
                      "c1": _conv_params(k1, cin, cmid, k),
                      "c2": _conv_params(k2, cmid, cmid, 1)})
    key, k9 = jax.random.split(key)
    frame9 = _conv_params(k9, hidden, 3 * hidden, 1)

    key, k1, k2, k3, k4, k5, k6, k7, k8 = jax.random.split(key, 9)
    se, te = _fold_bn(k3, embed)
    sh, th = _fold_bn(k6, head_hidden)
    # Pre-pad the classifier to a lane-dense multiple of 128 at build time
    # (removes the per-forward jnp.pad from the critical path).
    n_pad = -(-n_classes // 128) * 128
    wf = 0.05 * jax.random.normal(k7, (head_hidden, n_classes), jnp.float32)
    bf = 0.05 * jax.random.normal(k8, (1, n_classes), jnp.float32)
    head_p = {
        "we": (0.05 * jax.random.normal(k1, (6 * hidden, embed), jnp.float32)).astype(jnp.bfloat16),
        "be": 0.05 * jax.random.normal(k2, (1, embed), jnp.float32),
        "se": se, "te": te,
        "wh": (0.05 * jax.random.normal(k4, (embed, head_hidden), jnp.float32)).astype(jnp.bfloat16),
        "bh": 0.05 * jax.random.normal(k5, (1, head_hidden), jnp.float32),
        "sh": sh, "th": th,
        "wf": jnp.pad(wf, ((0, 0), (0, n_pad - n_classes))).astype(jnp.bfloat16),
        "bf": jnp.pad(bf, ((0, 0), (0, n_pad - n_classes))),
    }
    return {"pairs": pairs, "frame9": frame9, "head": head_p, "num_classes": n_classes}


# ---------------------------------------------------------------------------
# Main
# ---------------------------------------------------------------------------

if __name__ == "__main__":
    # Small stand-ins for the production sizes (feat=60, hidden=1024, embed=512,
    # n_classes=7000); tiling constants were chosen for production shapes and fall
    # back to full-dim tiles here.
    B = 2           # batch
    T = 32          # frames (total context shrink = 22, so T_final = 10)
    FEAT = 16       # features_per_frames
    HIDDEN = 32     # hidden_features
    EMBED = 32      # embed_features
    HEAD_HIDDEN = 32
    N_CLASSES = 16  # num_classes

    key = jax.random.PRNGKey(0)
    kx, kp = jax.random.split(key)
    x = jax.random.normal(kx, (B, T, FEAT), jnp.float32)   # (batch, time, features)
    params = make_params(kp, FEAT, HIDDEN, EMBED, HEAD_HIDDEN, N_CLASSES)

    logits = etdnn_forward(x, params)
    jax.block_until_ready(logits)
    assert logits.shape == (B, N_CLASSES), logits.shape
    assert bool(jnp.all(jnp.isfinite(logits)))

    # Tolerance-asserted reference check (same bf16 weights / intermediate casts,
    # so only reduction-order differences remain).
    ref = etdnn_reference(x, params)
    err = float(jnp.max(jnp.abs(logits - ref)))
    assert err < 1e-2, f"max |kernel - ref| = {err}"

    print("KERNEL_OK")
</pallas_src>

<mosaic_0001>
module attributes {stable_mosaic.version = 11 : i64} {
  func.func @_tdnn_pair_kernel(%arg0: i32, %arg1: memref<1x28x80xbf16, #tpu.memory_space<vmem>>, %arg2: memref<80x32xbf16, #tpu.memory_space<vmem>>, %arg3: memref<1x32xf32, #tpu.memory_space<vmem>>, %arg4: memref<1x32xf32, #tpu.memory_space<vmem>>, %arg5: memref<1x32xf32, #tpu.memory_space<vmem>>, %arg6: memref<32x32xbf16, #tpu.memory_space<vmem>>, %arg7: memref<1x32xf32, #tpu.memory_space<vmem>>, %arg8: memref<1x32xf32, #tpu.memory_space<vmem>>, %arg9: memref<1x32xf32, #tpu.memory_space<vmem>>, %arg10: memref<1x28x32xbf16, #tpu.memory_space<vmem>>) attributes {dimension_semantics = [#tpu.dimension_semantics<parallel>], iteration_bounds = array<i64: 2>, scalar_prefetch = 0 : i64, scratch_operands = 0 : i64, tpu.core_type = #tpu.core_type<tc>, window_params = [{transform_indices = @transform_0, window_bounds = array<i64: 1, 28, 80>}, {pipeline_mode = #tpu.pipeline_mode<synchronous>, transform_indices = @transform_1, window_bounds = array<i64: 80, 32>}, {pipeline_mode = #tpu.pipeline_mode<synchronous>, transform_indices = @transform_2, window_bounds = array<i64: 1, 32>}, {pipeline_mode = #tpu.pipeline_mode<synchronous>, transform_indices = @transform_3, window_bounds = array<i64: 1, 32>}, {pipeline_mode = #tpu.pipeline_mode<synchronous>, transform_indices = @transform_4, window_bounds = array<i64: 1, 32>}, {pipeline_mode = #tpu.pipeline_mode<synchronous>, transform_indices = @transform_5, window_bounds = array<i64: 32, 32>}, {pipeline_mode = #tpu.pipeline_mode<synchronous>, transform_indices = @transform_6, window_bounds = array<i64: 1, 32>}, {pipeline_mode = #tpu.pipeline_mode<synchronous>, transform_indices = @transform_7, window_bounds = array<i64: 1, 32>}, {pipeline_mode = #tpu.pipeline_mode<synchronous>, transform_indices = @transform_8, window_bounds = array<i64: 1, 32>}, {transform_indices = @transform_9, window_bounds = array<i64: 1, 28, 32>}]} {
    %c0 = arith.constant 0 : index
    %c0_0 = arith.constant 0 : index
    %c0_1 = arith.constant 0 : index
    %0 = vector.load %arg1[%c0, %c0_0, %c0_1] : memref<1x28x80xbf16, #tpu.memory_space<vmem>>, vector<1x28x80xbf16>
    %1 = vector.shape_cast %0 : vector<1x28x80xbf16> to vector<28x80xbf16>
    %c0_2 = arith.constant 0 : index
    %c0_3 = arith.constant 0 : index
    %2 = vector.load %arg2[%c0_2, %c0_3] : memref<80x32xbf16, #tpu.memory_space<vmem>>, vector<80x32xbf16>
    %cst = arith.constant dense<0.000000e+00> : vector<28x32xf32>
    %3 = tpu.matmul %1, %2, %cst {dimension_numbers = #tpu.dot_dimension_numbers<[1], [0], [0], [1], [0, 0, 1, 1], [], []>} : vector<28x80xbf16>, vector<80x32xbf16>, vector<28x32xf32> -> vector<28x32xf32>
    %c0_4 = arith.constant 0 : index
    %c0_5 = arith.constant 0 : index
    %4 = vector.load %arg3[%c0_4, %c0_5] : memref<1x32xf32, #tpu.memory_space<vmem>>, vector<1x32xf32>
    %5 = vector.broadcast %4 : vector<1x32xf32> to vector<28x32xf32>
    %6 = arith.addf %3, %5 : vector<28x32xf32>
    %cst_6 = arith.constant 0.000000e+00 : f32
    %7 = vector.broadcast %cst_6 : f32 to vector<28x32xf32>
    %8 = arith.cmpf oge, %6, %7 : vector<28x32xf32>
    %cst_7 = arith.constant 0.00999999977 : f32
    %9 = vector.broadcast %cst_7 : f32 to vector<28x32xf32>
    %10 = arith.mulf %9, %6 : vector<28x32xf32>
    %11 = arith.select %8, %6, %10 : vector<28x32xi1>, vector<28x32xf32>
    %c0_8 = arith.constant 0 : index
    %c0_9 = arith.constant 0 : index
    %12 = vector.load %arg4[%c0_8, %c0_9] : memref<1x32xf32, #tpu.memory_space<vmem>>, vector<1x32xf32>
    %13 = vector.broadcast %12 : vector<1x32xf32> to vector<28x32xf32>
    %14 = arith.mulf %11, %13 : vector<28x32xf32>
    %c0_10 = arith.constant 0 : index
    %c0_11 = arith.constant 0 : index
    %15 = vector.load %arg5[%c0_10, %c0_11] : memref<1x32xf32, #tpu.memory_space<vmem>>, vector<1x32xf32>
    %16 = vector.broadcast %15 : vector<1x32xf32> to vector<28x32xf32>
    %17 = arith.addf %14, %16 : vector<28x32xf32>
    %18 = arith.truncf %17 : vector<28x32xf32> to vector<28x32xbf16>
    %c0_12 = arith.constant 0 : index
    %c0_13 = arith.constant 0 : index
    %19 = vector.load %arg6[%c0_12, %c0_13] : memref<32x32xbf16, #tpu.memory_space<vmem>>, vector<32x32xbf16>
    %cst_14 = arith.constant dense<0.000000e+00> : vector<28x32xf32>
    %20 = tpu.matmul %18, %19, %cst_14 {dimension_numbers = #tpu.dot_dimension_numbers<[1], [0], [0], [1], [0, 0, 1, 1], [], []>} : vector<28x32xbf16>, vector<32x32xbf16>, vector<28x32xf32> -> vector<28x32xf32>
    %c0_15 = arith.constant 0 : index
    %c0_16 = arith.constant 0 : index
    %21 = vector.load %arg7[%c0_15, %c0_16] : memref<1x32xf32, #tpu.memory_space<vmem>>, vector<1x32xf32>
    %22 = vector.broadcast %21 : vector<1x32xf32> to vector<28x32xf32>
    %23 = arith.addf %20, %22 : vector<28x32xf32>
    %cst_17 = arith.constant 0.000000e+00 : f32
    %24 = vector.broadcast %cst_17 : f32 to vector<28x32xf32>
    %25 = arith.cmpf oge, %23, %24 : vector<28x32xf32>
    %cst_18 = arith.constant 0.00999999977 : f32
    %26 = vector.broadcast %cst_18 : f32 to vector<28x32xf32>
    %27 = arith.mulf %26, %23 : vector<28x32xf32>
    %28 = arith.select %25, %23, %27 : vector<28x32xi1>, vector<28x32xf32>
    %c0_19 = arith.constant 0 : index
    %c0_20 = arith.constant 0 : index
    %29 = vector.load %arg8[%c0_19, %c0_20] : memref<1x32xf32, #tpu.memory_space<vmem>>, vector<1x32xf32>
    %30 = vector.broadcast %29 : vector<1x32xf32> to vector<28x32xf32>
    %31 = arith.mulf %28, %30 : vector<28x32xf32>
    %c0_21 = arith.constant 0 : index
    %c0_22 = arith.constant 0 : index
    %32 = vector.load %arg9[%c0_21, %c0_22] : memref<1x32xf32, #tpu.memory_space<vmem>>, vector<1x32xf32>
    %33 = vector.broadcast %32 : vector<1x32xf32> to vector<28x32xf32>
    %34 = arith.addf %31, %33 : vector<28x32xf32>
    %35 = arith.truncf %34 : vector<28x32xf32> to vector<28x32xbf16>
    %c0_23 = arith.constant 0 : index
    %c0_24 = arith.constant 0 : index
    %c0_25 = arith.constant 0 : index
    %36 = vector.load %arg10[%c0_23, %c0_24, %c0_25] : memref<1x28x32xbf16, #tpu.memory_space<vmem>>, vector<1x28x32xbf16>
    %37 = vector.shape_cast %36 : vector<1x28x32xbf16> to vector<28x32xbf16>
    %38 = vector.shape_cast %35 : vector<28x32xbf16> to vector<1x28x32xbf16>
    tpu.vector_store %arg10[%c0_23, %c0_24, %c0_25], %38 {strides = array<i32>} : memref<1x28x32xbf16, #tpu.memory_space<vmem>>, vector<1x28x32xbf16>,
    return
  }
  func.func @transform_0(%arg0: i32) -> (i32, i32, i32) {
    %c0_i32 = arith.constant 0 : i32
    %c0_i32_0 = arith.constant 0 : i32
    %c0_i32_1 = arith.constant 0 : i32
    return %arg0, %c0_i32, %c0_i32_0 : i32, i32, i32
  }
  func.func @transform_1(%arg0: i32) -> (i32, i32) {
    %c0_i32 = arith.constant 0 : i32
    %c0_i32_0 = arith.constant 0 : i32
    %c0_i32_1 = arith.constant 0 : i32
    return %c0_i32, %c0_i32_0 : i32, i32
  }
  func.func @transform_2(%arg0: i32) -> (i32, i32) {
    %c0_i32 = arith.constant 0 : i32
    %c0_i32_0 = arith.constant 0 : i32
    %c0_i32_1 = arith.constant 0 : i32
    return %c0_i32, %c0_i32_0 : i32, i32
  }
  func.func @transform_3(%arg0: i32) -> (i32, i32) {
    %c0_i32 = arith.constant 0 : i32
    %c0_i32_0 = arith.constant 0 : i32
    %c0_i32_1 = arith.constant 0 : i32
    return %c0_i32, %c0_i32_0 : i32, i32
  }
  func.func @transform_4(%arg0: i32) -> (i32, i32) {
    %c0_i32 = arith.constant 0 : i32
    %c0_i32_0 = arith.constant 0 : i32
    %c0_i32_1 = arith.constant 0 : i32
    return %c0_i32, %c0_i32_0 : i32, i32
  }
  func.func @transform_5(%arg0: i32) -> (i32, i32) {
    %c0_i32 = arith.constant 0 : i32
    %c0_i32_0 = arith.constant 0 : i32
    %c0_i32_1 = arith.constant 0 : i32
    return %c0_i32, %c0_i32_0 : i32, i32
  }
  func.func @transform_6(%arg0: i32) -> (i32, i32) {
    %c0_i32 = arith.constant 0 : i32
    %c0_i32_0 = arith.constant 0 : i32
    %c0_i32_1 = arith.constant 0 : i32
    return %c0_i32, %c0_i32_0 : i32, i32
  }
  func.func @transform_7(%arg0: i32) -> (i32, i32) {
    %c0_i32 = arith.constant 0 : i32
    %c0_i32_0 = arith.constant 0 : i32
    %c0_i32_1 = arith.constant 0 : i32
    return %c0_i32, %c0_i32_0 : i32, i32
  }
  func.func @transform_8(%arg0: i32) -> (i32, i32) {
    %c0_i32 = arith.constant 0 : i32
    %c0_i32_0 = arith.constant 0 : i32
    %c0_i32_1 = arith.constant 0 : i32
    return %c0_i32, %c0_i32_0 : i32, i32
  }
  func.func @transform_9(%arg0: i32) -> (i32, i32, i32) {
    %c0_i32 = arith.constant 0 : i32
    %c0_i32_0 = arith.constant 0 : i32
    %c0_i32_1 = arith.constant 0 : i32
    return %arg0, %c0_i32, %c0_i32_0 : i32, i32, i32
  }
}

</mosaic_0001>

<llo_original>
// kernel: tpu_custom_call.1
$region0: #{tpu_custom_call.1}
  #allocation0 [shape = 'u32[]', space=smem, size = 0x4, offset = 0x4, fixed_abs, tag = 'smem constant byte address 0x4 - core index']
  #allocation1 [shape = 'u32[72,128]{1,0:T(1,128)}', space=vmem, size = 0x9000, scoped, tag = 'internal scratch']
  %s0 = inlined_call_operand.vmem [shape: bf16[2,28,80], index: 0, kind: input, shape index: {}]
  %s1 = inlined_call_operand.vmem [shape: bf16[80,32], index: 1, kind: input, shape index: {}]
  %s2 = inlined_call_operand.vmem [shape: f32[1,32], index: 2, kind: input, shape index: {}]
  %s3 = inlined_call_operand.vmem [shape: f32[1,32], index: 3, kind: input, shape index: {}]
  %s4 = inlined_call_operand.vmem [shape: f32[1,32], index: 4, kind: input, shape index: {}]
  %s5 = inlined_call_operand.vmem [shape: bf16[32,32], index: 5, kind: input, shape index: {}]
  %s6 = inlined_call_operand.vmem [shape: f32[1,32], index: 6, kind: input, shape index: {}]
  %s7 = inlined_call_operand.vmem [shape: f32[1,32], index: 7, kind: input, shape index: {}]
  %s8 = inlined_call_operand.vmem [shape: f32[1,32], index: 8, kind: input, shape index: {}]
  %s9 = inlined_call_operand.vmem [shape: bf16[2,28,32], index: 9, kind: output, shape index: {}]
  %s10 = sld [smem:[#allocation0]]
  $region69: #{tpu_custom_call.1} parent=0
    _
  %s12 = ssub.s32 1, %s10
  %s13 = scalar_select 0, %s12, %s10
  loop: start=0, step=1, limit=4
  $region2: #{tpu_custom_call.1} parent=0 // loop_pre_header
    _
  $region3: #{tpu_custom_call.1} parent=0 // loop_header
    %s15 = sphi 0, %s19
    %p16 = scmp.ge.s32.totalorder %s15, 4
    %s25 = sphi 0, %s27
    %s28 = sphi 0, %s25
    %s29 = sphi 0, %s28
    %s45 = sphi 0, %s29
    %s49 = sphi 0, %s49
    %s51 = sphi 0, %s49
    %s52 = sphi 0, %s51
    %s66 = sphi 0, %s52
    %s70 = sphi 0, %s70
    %s72 = sphi 0, %s70
    %s73 = sphi 0, %s72
    %s87 = sphi 0, %s73
    %s91 = sphi 0, %s91
    %s93 = sphi 0, %s91
    %s94 = sphi 0, %s93
    %s108 = sphi 0, %s94
    %s112 = sphi 0, %s112
    %s114 = sphi 0, %s112
    %s115 = sphi 0, %s114
    %s129 = sphi 0, %s115
    %s133 = sphi 0, %s133
    %s135 = sphi 0, %s133
    %s136 = sphi 0, %s135
    %s150 = sphi 0, %s136
    %s154 = sphi 0, %s154
    %s156 = sphi 0, %s154
    %s157 = sphi 0, %s156
    %s171 = sphi 0, %s157
    %s175 = sphi 0, %s175
    %s177 = sphi 0, %s175
    %s178 = sphi 0, %s177
    %s192 = sphi 0, %s178
    %s196 = sphi 0, %s196
    %s198 = sphi 0, %s196
    %s199 = sphi 0, %s198
    %s213 = sphi 0, %s199
    %s219 = sphi 0, %s221
    %s222 = sphi 0, %s219
    %s223 = sphi 0, %s222
    %s239 = sphi 0, %s223
  $region4: #{tpu_custom_call.1} parent=0 // loop_header_branch
    %18 = sbr.rel (%p16) target = $region8
  $region5: #{tpu_custom_call.1} parent=0 // loop_body
    %s20 = ssub.s32 %s15, 1
    %s21 = ssub.s32 %s15, 2
    %s22 = sadd.s32 %s15, 1
    %s23 = ssub.s32 %s15, %s22
    %p24 = scmp.eq.s32.totalorder %s23, 0
    %s26 = sadd.s32 %s25, 1
    %s27 = scalar_select %p24, %s25, %s26
    %p30 = pneg %p24
    %p31 = scmp.eq.s32.totalorder %s15, 1
    %p32 = por %p30, %p31
    %p33 = scmp.ne.s32.totalorder %s25, %s28
    %p34 = scmp.eq.s32.totalorder %s15, 0
    %p35 = por %p33, %p34
    %p36 = scmp.ne.s32.totalorder %s25, %s28
    %p37 = scmp.eq.s32.totalorder %s20, 1
    %p38 = por %p36, %p37
    %p39 = scmp.ne.s32.totalorder %s28, %s29
    %p40 = scmp.eq.s32.totalorder %s20, 0
    %p41 = por %p39, %p40
    %p42 = scmp.ne.s32.totalorder %s28, %s29
    %p43 = scmp.eq.s32.totalorder %s21, 1
    %p44 = por %p42, %p43
    %p46 = scmp.ne.s32.totalorder %s29, %s45
    %p47 = scmp.eq.s32.totalorder %s21, 0
    %p48 = por %p46, %p47
    %s50 = sadd.s32 %s49, 1
    %p53 = scmp.eq.s32.totalorder %s15, 1
    %p54 = scmp.ne.s32.totalorder %s49, %s51
    %p55 = scmp.eq.s32.totalorder %s15, 0
    %p56 = por %p54, %p55
    %p57 = scmp.ne.s32.totalorder %s49, %s51
    %p58 = scmp.eq.s32.totalorder %s20, 1
    %p59 = por %p57, %p58
    %p60 = scmp.ne.s32.totalorder %s51, %s52
    %p61 = scmp.eq.s32.totalorder %s20, 0
    %p62 = por %p60, %p61
    %p63 = scmp.ne.s32.totalorder %s51, %s52
    %p64 = scmp.eq.s32.totalorder %s21, 1
    %p65 = por %p63, %p64
    %p67 = scmp.ne.s32.totalorder %s52, %s66
    %p68 = scmp.eq.s32.totalorder %s21, 0
    %p69 = por %p67, %p68
    %s71 = sadd.s32 %s70, 1
    %p74 = scmp.eq.s32.totalorder %s15, 1
    %p75 = scmp.ne.s32.totalorder %s70, %s72
    %p76 = scmp.eq.s32.totalorder %s15, 0
    %p77 = por %p75, %p76
    %p78 = scmp.ne.s32.totalorder %s70, %s72
    %p79 = scmp.eq.s32.totalorder %s20, 1
    %p80 = por %p78, %p79
    %p81 = scmp.ne.s32.totalorder %s72, %s73
    %p82 = scmp.eq.s32.totalorder %s20, 0
    %p83 = por %p81, %p82
    %p84 = scmp.ne.s32.totalorder %s72, %s73
    %p85 = scmp.eq.s32.totalorder %s21, 1
    %p86 = por %p84, %p85
    %p88 = scmp.ne.s32.totalorder %s73, %s87
    %p89 = scmp.eq.s32.totalorder %s21, 0
    %p90 = por %p88, %p89
    %s92 = sadd.s32 %s91, 1
    %p95 = scmp.eq.s32.totalorder %s15, 1
    %p96 = scmp.ne.s32.totalorder %s91, %s93
    %p97 = scmp.eq.s32.totalorder %s15, 0
    %p98 = por %p96, %p97
    %p99 = scmp.ne.s32.totalorder %s91, %s93
    %p100 = scmp.eq.s32.totalorder %s20, 1
    %p101 = por %p99, %p100
    %p102 = scmp.ne.s32.totalorder %s93, %s94
    %p103 = scmp.eq.s32.totalorder %s20, 0
    %p104 = por %p102, %p103
    %p105 = scmp.ne.s32.totalorder %s93, %s94
    %p106 = scmp.eq.s32.totalorder %s21, 1
    %p107 = por %p105, %p106
    %p109 = scmp.ne.s32.totalorder %s94, %s108
    %p110 = scmp.eq.s32.totalorder %s21, 0
    %p111 = por %p109, %p110
    %s113 = sadd.s32 %s112, 1
    %p116 = scmp.eq.s32.totalorder %s15, 1
    %p117 = scmp.ne.s32.totalorder %s112, %s114
    %p118 = scmp.eq.s32.totalorder %s15, 0
    %p119 = por %p117, %p118
    %p120 = scmp.ne.s32.totalorder %s112, %s114
    %p121 = scmp.eq.s32.totalorder %s20, 1
    %p122 = por %p120, %p121
    %p123 = scmp.ne.s32.totalorder %s114, %s115
    %p124 = scmp.eq.s32.totalorder %s20, 0
    %p125 = por %p123, %p124
    %p126 = scmp.ne.s32.totalorder %s114, %s115
    %p127 = scmp.eq.s32.totalorder %s21, 1
    %p128 = por %p126, %p127
    %p130 = scmp.ne.s32.totalorder %s115, %s129
    %p131 = scmp.eq.s32.totalorder %s21, 0
    %p132 = por %p130, %p131
    %s134 = sadd.s32 %s133, 1
    %p137 = scmp.eq.s32.totalorder %s15, 1
    %p138 = scmp.ne.s32.totalorder %s133, %s135
    %p139 = scmp.eq.s32.totalorder %s15, 0
    %p140 = por %p138, %p139
    %p141 = scmp.ne.s32.totalorder %s133, %s135
    %p142 = scmp.eq.s32.totalorder %s20, 1
    %p143 = por %p141, %p142
    %p144 = scmp.ne.s32.totalorder %s135, %s136
    %p145 = scmp.eq.s32.totalorder %s20, 0
    %p146 = por %p144, %p145
    %p147 = scmp.ne.s32.totalorder %s135, %s136
    %p148 = scmp.eq.s32.totalorder %s21, 1
    %p149 = por %p147, %p148
    %p151 = scmp.ne.s32.totalorder %s136, %s150
    %p152 = scmp.eq.s32.totalorder %s21, 0
    %p153 = por %p151, %p152
    %s155 = sadd.s32 %s154, 1
    %p158 = scmp.eq.s32.totalorder %s15, 1
    %p159 = scmp.ne.s32.totalorder %s154, %s156
    %p160 = scmp.eq.s32.totalorder %s15, 0
    %p161 = por %p159, %p160
    %p162 = scmp.ne.s32.totalorder %s154, %s156
    %p163 = scmp.eq.s32.totalorder %s20, 1
    %p164 = por %p162, %p163
    %p165 = scmp.ne.s32.totalorder %s156, %s157
    %p166 = scmp.eq.s32.totalorder %s20, 0
    %p167 = por %p165, %p166
    %p168 = scmp.ne.s32.totalorder %s156, %s157
    %p169 = scmp.eq.s32.totalorder %s21, 1
    %p170 = por %p168, %p169
    %p172 = scmp.ne.s32.totalorder %s157, %s171
    %p173 = scmp.eq.s32.totalorder %s21, 0
    %p174 = por %p172, %p173
    %s176 = sadd.s32 %s175, 1
    %p179 = scmp.eq.s32.totalorder %s15, 1
    %p180 = scmp.ne.s32.totalorder %s175, %s177
    %p181 = scmp.eq.s32.totalorder %s15, 0
    %p182 = por %p180, %p181
    %p183 = scmp.ne.s32.totalorder %s175, %s177
    %p184 = scmp.eq.s32.totalorder %s20, 1
    %p185 = por %p183, %p184
    %p186 = scmp.ne.s32.totalorder %s177, %s178
    %p187 = scmp.eq.s32.totalorder %s20, 0
    %p188 = por %p186, %p187
    %p189 = scmp.ne.s32.totalorder %s177, %s178
    %p190 = scmp.eq.s32.totalorder %s21, 1
    %p191 = por %p189, %p190
    %p193 = scmp.ne.s32.totalorder %s178, %s192
    %p194 = scmp.eq.s32.totalorder %s21, 0
    %p195 = por %p193, %p194
    %s197 = sadd.s32 %s196, 1
    %p200 = scmp.eq.s32.totalorder %s15, 1
    %p201 = scmp.ne.s32.totalorder %s196, %s198
    %p202 = scmp.eq.s32.totalorder %s15, 0
    %p203 = por %p201, %p202
    %p204 = scmp.ne.s32.totalorder %s196, %s198
    %p205 = scmp.eq.s32.totalorder %s20, 1
    %p206 = por %p204, %p205
    %p207 = scmp.ne.s32.totalorder %s198, %s199
    %p208 = scmp.eq.s32.totalorder %s20, 0
    %p209 = por %p207, %p208
    %p210 = scmp.ne.s32.totalorder %s198, %s199
    %p211 = scmp.eq.s32.totalorder %s21, 1
    %p212 = por %p210, %p211
    %p214 = scmp.ne.s32.totalorder %s199, %s213
    %p215 = scmp.eq.s32.totalorder %s21, 0
    %p216 = por %p214, %p215
    %s217 = ssub.s32 %s15, %s22
    %p218 = scmp.eq.s32.totalorder %s217, 0
    %s220 = sadd.s32 %s219, 1
    %s221 = scalar_select %p218, %s219, %s220
    %p224 = pneg %p218
    %p225 = scmp.eq.s32.totalorder %s15, 1
    %p226 = por %p224, %p225
    %p227 = scmp.ne.s32.totalorder %s219, %s222
    %p228 = scmp.eq.s32.totalorder %s15, 0
    %p229 = por %p227, %p228
    %p230 = scmp.ne.s32.totalorder %s219, %s222
    %p231 = scmp.eq.s32.totalorder %s20, 1
    %p232 = por %p230, %p231
    %p233 = scmp.ne.s32.totalorder %s222, %s223
    %p234 = scmp.eq.s32.totalorder %s20, 0
    %p235 = por %p233, %p234
    %p236 = scmp.ne.s32.totalorder %s222, %s223
    %p237 = scmp.eq.s32.totalorder %s21, 1
    %p238 = por %p236, %p237
    %p240 = scmp.ne.s32.totalorder %s223, %s239
    %p241 = scmp.eq.s32.totalorder %s21, 0
    %p242 = por %p240, %p241
    %p243 = scmp.le.s32.totalorder 1, %s15
    %p244 = scmp.lt.s32.totalorder %s15, 3
    %p245 = pnand %p243, %p244
    %p246 = pneg %p245
    // Predicated region
    $region9: #{tpu_custom_call.1} parent=5 // pred_check
      _
    $region10: #{tpu_custom_call.1} parent=5 // pred_check_branch
      %248 = sbr.rel (%p245) target = $region12
    $region11: #{tpu_custom_call.1} parent=5 // pred_region
      %s249 = ssub.s32 %s15, 1
      // Predicated region
      $region13: #{tpu_custom_call.1} parent=11 // pred_check
        %p250 = pneg %p62
      $region14: #{tpu_custom_call.1} parent=11 // pred_check_branch
        %252 = sbr.rel (%p250) target = $region16
      $region15: #{tpu_custom_call.1} parent=11 // pred_region
        _
      $region16: #{tpu_custom_call.1} parent=11 // pred_fallthru
        _
      // Predicated region
      $region17: #{tpu_custom_call.1} parent=11 // pred_check
        %p253 = pneg %p83
      $region18: #{tpu_custom_call.1} parent=11 // pred_check_branch
        %255 = sbr.rel (%p253) target = $region20
      $region19: #{tpu_custom_call.1} parent=11 // pred_region
        _
      $region20: #{tpu_custom_call.1} parent=11 // pred_fallthru
        _
      // Predicated region
      $region21: #{tpu_custom_call.1} parent=11 // pred_check
        %p256 = pneg %p104
      $region22: #{tpu_custom_call.1} parent=11 // pred_check_branch
        %258 = sbr.rel (%p256) target = $region24
      $region23: #{tpu_custom_call.1} parent=11 // pred_region
        _
      $region24: #{tpu_custom_call.1} parent=11 // pred_fallthru
        _
      // Predicated region
      $region25: #{tpu_custom_call.1} parent=11 // pred_check
        %p259 = pneg %p125
      $region26: #{tpu_custom_call.1} parent=11 // pred_check_branch
        %261 = sbr.rel (%p259) target = $region28
      $region27: #{tpu_custom_call.1} parent=11 // pred_region
        _
      $region28: #{tpu_custom_call.1} parent=11 // pred_fallthru
        _
      // Predicated region
      $region29: #{tpu_custom_call.1} parent=11 // pred_check
        %p262 = pneg %p146
      $region30: #{tpu_custom_call.1} parent=11 // pred_check_branch
        %264 = sbr.rel (%p262) target = $region32
      $region31: #{tpu_custom_call.1} parent=11 // pred_region
        _
      $region32: #{tpu_custom_call.1} parent=11 // pred_fallthru
        _
      // Predicated region
      $region33: #{tpu_custom_call.1} parent=11 // pred_check
        %p265 = pneg %p167
      $region34: #{tpu_custom_call.1} parent=11 // pred_check_branch
        %267 = sbr.rel (%p265) target = $region36
      $region35: #{tpu_custom_call.1} parent=11 // pred_region
        _
      $region36: #{tpu_custom_call.1} parent=11 // pred_fallthru
        _
      // Predicated region
      $region37: #{tpu_custom_call.1} parent=11 // pred_check
        %p268 = pneg %p188
      $region38: #{tpu_custom_call.1} parent=11 // pred_check_branch
        %270 = sbr.rel (%p268) target = $region40
      $region39: #{tpu_custom_call.1} parent=11 // pred_region
        _
      $region40: #{tpu_custom_call.1} parent=11 // pred_fallthru
        _
      // Predicated region
      $region41: #{tpu_custom_call.1} parent=11 // pred_check
        %p271 = pneg %p209
      $region42: #{tpu_custom_call.1} parent=11 // pred_check_branch
        %273 = sbr.rel (%p271) target = $region44
      $region43: #{tpu_custom_call.1} parent=11 // pred_region
        _
      $region44: #{tpu_custom_call.1} parent=11 // pred_fallthru
        _
    $region12: #{tpu_custom_call.1} parent=5 // pred_fallthru
      _
    %p274 = scmp.lt.s32.totalorder %s15, 2
    // Predicated region
    $region45: #{tpu_custom_call.1} parent=5 // pred_check
      %p275 = pneg %p274
    $region46: #{tpu_custom_call.1} parent=5 // pred_check_branch
      %277 = sbr.rel (%p275) target = $region48
    $region47: #{tpu_custom_call.1} parent=5 // pred_region
      // Predicated region
      $region49: #{tpu_custom_call.1} parent=47 // pred_check
        %p278 = pneg %p35
      $region50: #{tpu_custom_call.1} parent=47 // pred_check_branch
        %280 = sbr.rel (%p278) target = $region52
      $region51: #{tpu_custom_call.1} parent=47 // pred_region
        %p281 = scmp.lt.s32.totalorder %s15, 1
        %s282 = scalar_select %p281, %s15, 1
        %s283 = smul.addr %s282, 4
        %s284 = smul.addr %s283, 4
        %s285 = scalar_lea.vmem %s0, %s284
      $region52: #{tpu_custom_call.1} parent=47 // pred_fallthru
        _
    $region48: #{tpu_custom_call.1} parent=5 // pred_fallthru
      _
    %p286 = scmp.le.s32.totalorder 1, %s15
    %p287 = scmp.lt.s32.totalorder %s15, 3
    %p288 = pnand %p286, %p287
    %p289 = pneg %p288
    // Predicated region
    $region53: #{tpu_custom_call.1} parent=5 // pred_check
      _
    $region54: #{tpu_custom_call.1} parent=5 // pred_check_branch
      %291 = sbr.rel (%p288) target = $region56
    $region55: #{tpu_custom_call.1} parent=5 // pred_region
      %s292 = ssub.s32 %s15, 1
      %p293 = scmp.lt.s32.totalorder %s20, 1
      %s294 = scalar_select %p293, %s20, 1
      %s295 = smul.addr %s294, 4
      %s296 = smul.addr %s295, 4
      %s297 = scalar_lea.vmem %s0, %s296
      %p298 = pneg %p41
      %p299 = pneg %p38
      %p300 = pneg %p62
      %p301 = pneg %p59
      %p302 = pneg %p83
      %p303 = pneg %p80
      %p304 = pneg %p104
      %p305 = pneg %p101
      %p306 = pneg %p125
      %p307 = pneg %p122
      %p308 = pneg %p146
      %p309 = pneg %p143
      %p310 = pneg %p167
      %p311 = pneg %p164
      %p312 = pneg %p188
      %p313 = pneg %p185
      %p314 = pneg %p209
      %p315 = pneg %p206
      %p316 = pneg %p235
      %p317 = pneg %p232
      %p318 = scmp.lt.s32.totalorder %s20, 1
      %s319 = scalar_select %p318, %s20, 1
      %s320 = smul.addr %s319, 4
      %s321 = smul.addr %s320, 4
      %s322 = scalar_lea.vmem %s9, %s321
      %p323 = scmp.lt.s32.totalorder %s20, 1
      %s324 = scalar_select %p323, %s20, 1
      %s325 = smul.addr %s324, 4
      %s326 = smul.addr %s325, 4
      %s327 = scalar_lea.vmem %s0, %s326
      %p328 = scmp.lt.s32.totalorder %s20, 1
      %s329 = scalar_select %p328, %s20, 1
      %s330 = smul.addr %s329, 4
      %s331 = smul.addr %s330, 4
      %s332 = scalar_lea.vmem %s9, %s331
      %v334 = vld [vmem:[%s327] sm:$0xf]
      %v335 = vld [vmem:[%s327 + $0x4] sm:$0xf]
      %v336 = vld [vmem:[%s327 + $0x8] sm:$0xf]
      %v337 = vld [vmem:[%s327 + $0xc] sm:$0x3]
      %v338 = vld [vmem:[%s1] sm:$0xf]
      %v339 = vld [vmem:[%s1 + $0x4] sm:$0xf]
      %v340 = vld [vmem:[%s1 + $0x8] sm:$0xf]
      %v341 = vld [vmem:[%s1 + $0xc] sm:$0xf]
      %v342 = vld [vmem:[%s1 + $0x10] sm:$0xf]
      %v343 = vld [vmem:[%s1 + $0x14] sm:$0xf]
      %v344 = vld [vmem:[%s1 + $0x18] sm:$0xf]
      %v345 = vld [vmem:[%s1 + $0x1c] sm:$0xf]
      %v346 = vld [vmem:[%s1 + $0x20] sm:$0xf]
      %v347 = vld [vmem:[%s1 + $0x24] sm:$0xf]
      %v348 = vld [vmem:[%s2] sm:$0x1]
      %v350 = vperm.slane %v348, 0
      %v356 = vunpack.c.l.b16 %v334
      %v357 = vunpack.c.l.b16 %v335
      %v358 = vunpack.c.l.b16 %v336
      %v359 = vunpack.c.l.b16 %v337
      %v360 = vpack.c.b16 %v357, %v356
      %v361 = vpack.c.b16 %v359, %v358
      %v372 = vunpack.c.l.b16 %v338
      %v373 = vunpack.c.l.b16 %v339
      %v374 = vunpack.c.l.b16 %v340
      %v375 = vunpack.c.l.b16 %v341
      %v376 = vunpack.c.l.b16 %v342
      %v377 = vunpack.c.l.b16 %v343
      %v378 = vunpack.c.l.b16 %v344
      %v379 = vunpack.c.l.b16 %v345
      %v380 = vunpack.c.l.b16 %v346
      %v381 = vunpack.c.l.b16 %v347
      %v382 = vpack.c.b16 %v373, %v372
      %v383 = vpack.c.b16 %v375, %v374
      %v384 = vpack.c.b16 %v377, %v376
      %v385 = vpack.c.b16 %v379, %v378
      %v386 = vpack.c.b16 %v381, %v380
      %vm392 = vcmask 654336
      %v394 = vsel %vm392, %v360, 0
      %v397 = vsel %vm392, %v361, 0
      %399 = vmatpush.bf16.msra.mxu0 0
      %400 = vmatpush.bf16.msra.mxu0 0
      %401 = vmatpush.bf16.msra.mxu0 0
      %402 = vmatpush.bf16.msra.mxu0 %v386
      %403 = vmatpush.bf16.msra.mxu0 %v385
      %404 = vmatpush.bf16.msra.mxu0 %v384
      %405 = vmatpush.bf16.msra.mxu0 %v383
      %406 = vmatpush.bf16.msra.mxu0 %v382
      %407 = vmatmul.bf16.gmra.mxu0 %v394
      %v408 = vpop.f32.mrf.mxu0
      %v409 = vadd.f32 %v350, %v408
      %v410 = vpop.f32.mrf.mxu0
      %v411 = vadd.f32 %v350, %v410
      %412 = vmatmul.bf16.gmra.mxu0 %v397
      %v413 = vpop.f32.mrf.mxu0
      %v414 = vadd.f32 %v350, %v413
      %v415 = vpop.f32.mrf.mxu0
      %v416 = vadd.f32 %v350, %v415
      %417 = vdwg.mxu0
      %vm418 = vcmp.ge.f32.partialorder %v409, 0.0
      %vm419 = vcmp.ge.f32.partialorder %v411, 0.0
      %vm420 = vcmp.ge.f32.partialorder %v414, 0.0
      %vm421 = vcmp.ge.f32.partialorder %v416, 0.0
      %v422 = vmul.f32 %v409, 0.01
      %v423 = vmul.f32 %v411, 0.01
      %v424 = vmul.f32 %v414, 0.01
      %v425 = vmul.f32 %v416, 0.01
      %v426 = vsel %vm418, %v409, %v422
      %v427 = vsel %vm419, %v411, %v423
      %v428 = vsel %vm420, %v414, %v424
      %v429 = vsel %vm421, %v416, %v425
      %v430 = vld [vmem:[%s3] sm:$0x1]
      %v432 = vperm.slane %v430, 0
      %v434 = vmul.f32 %v426, %v432
      %v435 = vmul.f32 %v427, %v432
      %v436 = vmul.f32 %v428, %v432
      %v437 = vmul.f32 %v429, %v432
      %v438 = vld [vmem:[%s4] sm:$0x1]
      %v440 = vperm.slane %v438, 0
      %v442 = vadd.f32 %v434, %v440
      %v443 = vadd.f32 %v435, %v440
      %v444 = vadd.f32 %v436, %v440
      %v445 = vadd.f32 %v437, %v440
      %v446 = vpack.c.bf16 %v443, %v442
      %v447 = vpack.c.bf16 %v445, %v444
      %v448 = vld [vmem:[%s5] sm:$0xf]
      %v449 = vld [vmem:[%s5 + $0x4] sm:$0xf]
      %v450 = vld [vmem:[%s5 + $0x8] sm:$0xf]
      %v451 = vld [vmem:[%s5 + $0xc] sm:$0xf]
      %v452 = vld [vmem:[%s6] sm:$0x1]
      %v454 = vperm.slane %v452, 0
      %v460 = vunpack.c.l.b16 %v448
      %v461 = vunpack.c.l.b16 %v449
      %v462 = vunpack.c.l.b16 %v450
      %v463 = vunpack.c.l.b16 %v451
      %v464 = vpack.c.b16 %v461, %v460
      %v465 = vpack.c.b16 %v463, %v462
      %vm468 = vcmask 261120
      %v470 = vsel %vm468, %v446, 0
      %v473 = vsel %vm468, %v447, 0
      %475 = vmatpush.bf16.msra.mxu0 0
      %476 = vmatpush.bf16.msra.mxu0 0
      %477 = vmatpush.bf16.msra.mxu0 0
      %478 = vmatpush.bf16.msra.mxu0 0
      %479 = vmatpush.bf16.msra.mxu0 0
      %480 = vmatpush.bf16.msra.mxu0 0
      %481 = vmatpush.bf16.msra.mxu0 %v465
      %482 = vmatpush.bf16.msra.mxu0 %v464
      %483 = vmatmul.bf16.gmra.mxu0 %v470
      %v484 = vpop.f32.mrf.mxu0
      %v485 = vadd.f32 %v454, %v484
      %v486 = vpop.f32.mrf.mxu0
      %v487 = vadd.f32 %v454, %v486
      %488 = vmatmul.bf16.gmra.mxu0 %v473
      %v489 = vpop.f32.mrf.mxu0
      %v490 = vadd.f32 %v454, %v489
      %v491 = vpop.f32.mrf.mxu0
      %v492 = vadd.f32 %v454, %v491
      %493 = vdwg.mxu0
      %vm494 = vcmp.ge.f32.partialorder %v485, 0.0
      %vm495 = vcmp.ge.f32.partialorder %v487, 0.0
      %vm496 = vcmp.ge.f32.partialorder %v490, 0.0
      %vm497 = vcmp.ge.f32.partialorder %v492, 0.0
      %v498 = vmul.f32 %v485, 0.01
      %v499 = vmul.f32 %v487, 0.01
      %v500 = vmul.f32 %v490, 0.01
      %v501 = vmul.f32 %v492, 0.01
      %v502 = vsel %vm494, %v485, %v498
      %v503 = vsel %vm495, %v487, %v499
      %v504 = vsel %vm496, %v490, %v500
      %v505 = vsel %vm497, %v492, %v501
      %v506 = vld [vmem:[%s7] sm:$0x1]
      %v508 = vperm.slane %v506, 0
      %v510 = vmul.f32 %v502, %v508
      %v511 = vmul.f32 %v503, %v508
      %v512 = vmul.f32 %v504, %v508
      %v513 = vmul.f32 %v505, %v508
      %v514 = vld [vmem:[%s8] sm:$0x1]
      %v516 = vperm.slane %v514, 0
      %v518 = vadd.f32 %v510, %v516
      %v519 = vadd.f32 %v511, %v516
      %v520 = vadd.f32 %v512, %v516
      %v521 = vadd.f32 %v513, %v516
      %v522 = vpack.c.bf16 %v518, %v518
      %v523 = vpack.c.bf16 %v519, %v519
      %v524 = vpack.c.bf16 %v520, %v520
      %v525 = vpack.c.bf16 %v521, %v521
      %vm526 = vcmask 257024
      %527 = vst.msk [vmem:[%s332] sm:$0xf] %vm526, %v522
      %528 = vst.msk [vmem:[%s332 + $0x4] sm:$0xf] %vm526, %v523
      %529 = vst.msk [vmem:[%s332 + $0x8] sm:$0xf] %vm526, %v524
      %vm530 = vcmask 254976
      %531 = vst.msk [vmem:[%s332 + $0xc] sm:$0x3] %vm530, %v525
      %p532 = scmp.lt.s32.totalorder %s20, 1
      %s533 = scalar_select %p532, %s20, 1
      %s534 = smul.addr %s533, 4
      %s535 = smul.addr %s534, 4
      %s536 = scalar_lea.vmem %s9, %s535
      // Predicated region
      $region57: #{tpu_custom_call.1} parent=55 // pred_check
        %p537 = pneg %p232
      $region58: #{tpu_custom_call.1} parent=55 // pred_check_branch
        %539 = sbr.rel (%p537) target = $region60
      $region59: #{tpu_custom_call.1} parent=55 // pred_region
        _
      $region60: #{tpu_custom_call.1} parent=55 // pred_fallthru
        _
    $region56: #{tpu_custom_call.1} parent=5 // pred_fallthru
      _
    %p540 = scmp.le.s32.totalorder 2, %s15
    // Predicated region
    $region61: #{tpu_custom_call.1} parent=5 // pred_check
      %p541 = pneg %p540
    $region62: #{tpu_custom_call.1} parent=5 // pred_check_branch
      %543 = sbr.rel (%p541) target = $region64
    $region63: #{tpu_custom_call.1} parent=5 // pred_region
      %s544 = ssub.s32 %s15, 2
      // Predicated region
      $region65: #{tpu_custom_call.1} parent=63 // pred_check
        %p545 = pneg %p238
      $region66: #{tpu_custom_call.1} parent=63 // pred_check_branch
        %547 = sbr.rel (%p545) target = $region68
      $region67: #{tpu_custom_call.1} parent=63 // pred_region
        %p548 = scmp.lt.s32.totalorder %s21, 1
        %s549 = scalar_select %p548, %s21, 1
        %s550 = smul.addr %s549, 4
        %s551 = smul.addr %s550, 4
        %s552 = scalar_lea.vmem %s9, %s551
      $region68: #{tpu_custom_call.1} parent=63 // pred_fallthru
        _
    $region64: #{tpu_custom_call.1} parent=5 // pred_fallthru
      _
  $region6: #{tpu_custom_call.1} parent=0 // loop_footer
    %s19 = sadd.s32 1, %s15
  $region7: #{tpu_custom_call.1} parent=0 // loop_footer_branch
    %14 = sbr.rel target = $region3
  $region8: #{tpu_custom_call.1} parent=0 // loop_exit
    _

</llo_original>
